<compile_context>
chip_gen: v6e
topology: v6e:2x2x1
jax: 0.10.0
libtpu: 0.0.40
codegen_flags: <defaults>
</compile_context>

<pallas_src>
import jax
import jax.numpy as jnp
import numpy as np
from jax.experimental import pallas as pl
from jax.experimental.pallas import tpu as pltpu


def _round_up(x, m):
    return ((x + m - 1) // m) * m


def _integrand_kernel(xh_ref, w1_ref, b1_ref, w2_ref, b2_ref, w3_ref, b3_ref,
                      o_ref):
    """One batch tile. xh_ref: (d_in, tb) feature-major, o_ref: (n_out, tb)."""
    # --- layer 1: Linear (concat already fused into one K=d_in dot) + ReLU ---
    z1 = jnp.dot(w1_ref[...], xh_ref[...], preferred_element_type=jnp.float32)
    a1 = jnp.maximum(z1 + b1_ref[...], 0.0)              # (H1, tb)

    # --- layer 2: Linear + ReLU ---
    z2 = jnp.dot(w2_ref[...], a1, preferred_element_type=jnp.float32)
    a2 = jnp.maximum(z2 + b2_ref[...], 0.0)              # (H2, tb)

    # --- layer 3: Linear + (ELU(alpha=1) + 1) ---
    z3 = jnp.dot(w3_ref[...], a2, preferred_element_type=jnp.float32)
    z3 = z3 + b3_ref[...]                                # (n_out, tb)
    # ELU(z) + 1 == z + 1 for z > 0 and exp(z) for z <= 0 (exact; also avoids
    # the expm1 cancellation of the naive formulation).
    o_ref[...] = jnp.where(z3 > 0.0, z3 + 1.0, jnp.exp(z3)).astype(o_ref.dtype)


def integrand_nn_forward_t(xh_t, params, *, block_b=16384):
    """Fast path.  xh_t = cat(x, h)^T, feature-major, shape (dx+dh, B).
    Returns (n_out, B).  Weights are nn.Linear (out, in) layout."""
    w1, b1, w2, b2, w3, b3 = params
    d_in, B = xh_t.shape
    h1, h2, n_out = w1.shape[0], w2.shape[0], w3.shape[0]
    assert w1.shape[1] == d_in and w2.shape[1] == h1 and w3.shape[1] == h2

    f32 = jnp.float32
    block_b = max(128, _round_up(int(block_b), 128))

    # Batch tile (lane axis).  Large tiles amortize the ~0.35 us fixed
    # per-grid-step overhead; the 16K default stays within ~0.5 KiB VMEM per
    # batch lane (~8 MiB), under every chip's scoped-VMEM default.  Moderate
    # batches are split into >= 2 blocks so a v7x megacore has work for both
    # TensorCores.
    if B <= 128:
        tb = B                                   # single tiny (full) block
    else:
        tb = min(block_b, _round_up(pl.cdiv(B, 2), 128))
    n_blocks = pl.cdiv(B, tb)   # ragged last block handled by Pallas masking

    # Rough VMEM need: double-buffered (8, tb)-padded xh/out tiles plus two
    # (H, tb) f32 activation slabs plus slack.  Raise the scoped limit only
    # when we exceed v5e's 16 MiB default; cap with headroom under v7x's
    # 64 MiB physical VMEM per TensorCore.
    vmem_est = 2 * 2 * 8 * tb * 4 + 2 * max(h1, h2) * tb * 4 + (2 << 20)
    vmem_limit = None
    if vmem_est > 14 * (1 << 20):
        vmem_limit = int(min(max(int(vmem_est * 1.25), 32 << 20), 56 << 20))

    w1c = w1.astype(f32)                         # (H1, d_in)
    w2c = w2.astype(f32)                         # (H2, H1)
    w3c = w3.astype(f32)                         # (n_out, H2)
    b1c = b1.reshape(h1, 1).astype(f32)
    b2c = b2.reshape(h2, 1).astype(f32)
    b3c = b3.reshape(n_out, 1).astype(f32)

    # Tiny weights/biases: constant index_map -> resident across grid steps.
    def resident(arr):
        return pl.BlockSpec(arr.shape, lambda i: (0,) * arr.ndim)

    out_t = pl.pallas_call(
        _integrand_kernel,
        grid=(n_blocks,),
        out_shape=jax.ShapeDtypeStruct((n_out, B), f32),
        in_specs=[
            pl.BlockSpec((d_in, tb), lambda i: (0, i)),     # xh^T batch tile
            resident(w1c), resident(b1c),
            resident(w2c), resident(b2c),
            resident(w3c), resident(b3c),
        ],
        out_specs=pl.BlockSpec((n_out, tb), lambda i: (0, i)),
        compiler_params=pltpu.CompilerParams(
            # Batch tiles are independent: v7x splits them across its two
            # TensorCores; no-op on single-TC v5e/v6e.
            dimension_semantics=("parallel",),
            vmem_limit_bytes=vmem_limit,
        ),
    )(xh_t.astype(f32), w1c, b1c, w2c, b2c, w3c, b3c)
    return out_t


def integrand_nn_forward(x, h, params, *, block_b=16384):
    """PyTorch-interface wrapper: x (B, dx), h (B, dh) -> (B, n_out).

    Does ONE XLA concat+transpose to build the feature-major slab the kernel
    wants; producers that can emit cat(x, h)^T directly should call
    integrand_nn_forward_t and skip that HBM round trip entirely.
    """
    xh_t = jnp.concatenate([x, h], axis=1).astype(jnp.float32).T  # (dx+dh, B)
    out_t = integrand_nn_forward_t(xh_t, params, block_b=block_b)
    return out_t.T          # (B, n_out); for n_out == 1 this is a free reshape


def init_params(key, in_d, hidden_layers, n_out=1):
    """Deterministic init matching nn.Linear shapes (weights stored (out, in))."""
    hs = [in_d] + list(hidden_layers) + [n_out]
    params = []
    for h0, h1 in zip(hs, hs[1:]):
        key, kw, kb = jax.random.split(key, 3)
        bound = 1.0 / float(np.sqrt(h0))
        w = jax.random.uniform(kw, (h1, h0), jnp.float32, -bound, bound)
        b = jax.random.uniform(kb, (h1,), jnp.float32, -bound, bound)
        params.extend([w, b])
    return tuple(params)


def _reference_forward_np(x, h, params):
    """True-f32 NumPy reference of the PyTorch module."""
    w1, b1, w2, b2, w3, b3 = [np.asarray(p, np.float32) for p in params]
    a = np.concatenate([np.asarray(x, np.float32), np.asarray(h, np.float32)], 1)
    a = np.maximum(a @ w1.T + b1, 0.0)
    a = np.maximum(a @ w2.T + b2, 0.0)
    z = a @ w3.T + b3
    return np.where(z > 0.0, z, np.expm1(z)) + 1.0


if __name__ == "__main__":
    key = jax.random.PRNGKey(0)
    kx, kh, kp = jax.random.split(key, 3)

    dx, dh = 1, 3                       # in_d = dx + dh = 4
    hidden_layers = [32, 32]
    n_out = 1
    params = init_params(kp, dx + dh, hidden_layers, n_out)

    # Case 1: tiny batch (single full block).
    # Case 2: moderate batch -> two blocks with a ragged second tile
    #         (megacore split + masked partial store path).
    # Case 3: small tile forced -> several grid steps + ragged last tile.
    for B, blk in ((8, 16384), (300, 16384), (1000, 256)):
        kx, kxx = jax.random.split(kx)
        kh, khh = jax.random.split(kh)
        x = jax.random.normal(kxx, (B, dx), jnp.float32)
        h = jax.random.normal(khh, (B, dh), jnp.float32)

        out = integrand_nn_forward(x, h, params, block_b=blk)
        jax.block_until_ready(out)
        assert out.shape == (B, n_out)

        ref = _reference_forward_np(x, h, params)
        out_np = np.asarray(out)
        # Tolerance accounts for the MXU possibly running bf16 passes for f32
        # operands at default precision (pass precision=HIGHEST to the
        # in-kernel dots if bit-accurate f32 is required).
        max_diff = float(np.max(np.abs(out_np - ref)))
        assert np.isfinite(out_np).all()
        assert np.allclose(out_np, ref, atol=3e-2, rtol=3e-2), max_diff

    print("KERNEL_OK")
</pallas_src>

<mosaic_0001>
module attributes {stable_mosaic.version = 11 : i64} {
  func.func @_integrand_kernel(%arg0: i32, %arg1: memref<4x8xf32, #tpu.memory_space<vmem>>, %arg2: memref<32x4xf32, #tpu.memory_space<vmem>>, %arg3: memref<32x1xf32, #tpu.memory_space<vmem>>, %arg4: memref<32x32xf32, #tpu.memory_space<vmem>>, %arg5: memref<32x1xf32, #tpu.memory_space<vmem>>, %arg6: memref<1x32xf32, #tpu.memory_space<vmem>>, %arg7: memref<1x1xf32, #tpu.memory_space<vmem>>, %arg8: memref<1x8xf32, #tpu.memory_space<vmem>>) attributes {dimension_semantics = [#tpu.dimension_semantics<parallel>], iteration_bounds = array<i64: 1>, scalar_prefetch = 0 : i64, scratch_operands = 0 : i64, tpu.core_type = #tpu.core_type<tc>, window_params = [{transform_indices = @transform_0, window_bounds = array<i64: 4, 8>}, {pipeline_mode = #tpu.pipeline_mode<synchronous>, transform_indices = @transform_1, window_bounds = array<i64: 32, 4>}, {pipeline_mode = #tpu.pipeline_mode<synchronous>, transform_indices = @transform_2, window_bounds = array<i64: 32, 1>}, {pipeline_mode = #tpu.pipeline_mode<synchronous>, transform_indices = @transform_3, window_bounds = array<i64: 32, 32>}, {pipeline_mode = #tpu.pipeline_mode<synchronous>, transform_indices = @transform_4, window_bounds = array<i64: 32, 1>}, {pipeline_mode = #tpu.pipeline_mode<synchronous>, transform_indices = @transform_5, window_bounds = array<i64: 1, 32>}, {pipeline_mode = #tpu.pipeline_mode<synchronous>, transform_indices = @transform_6, window_bounds = array<i64: 1, 1>}, {transform_indices = @transform_7, window_bounds = array<i64: 1, 8>}]} {
    %c0 = arith.constant 0 : index
    %c0_0 = arith.constant 0 : index
    %0 = vector.load %arg2[%c0, %c0_0] : memref<32x4xf32, #tpu.memory_space<vmem>>, vector<32x4xf32>
    %c0_1 = arith.constant 0 : index
    %c0_2 = arith.constant 0 : index
    %1 = vector.load %arg1[%c0_1, %c0_2] : memref<4x8xf32, #tpu.memory_space<vmem>>, vector<4x8xf32>
    %cst = arith.constant dense<0.000000e+00> : vector<32x8xf32>
    %2 = tpu.matmul %0, %1, %cst {dimension_numbers = #tpu.dot_dimension_numbers<[1], [0], [0], [1], [0, 0, 1, 1], [], []>} : vector<32x4xf32>, vector<4x8xf32>, vector<32x8xf32> -> vector<32x8xf32>
    %c0_3 = arith.constant 0 : index
    %c0_4 = arith.constant 0 : index
    %3 = vector.load %arg3[%c0_3, %c0_4] : memref<32x1xf32, #tpu.memory_space<vmem>>, vector<32x1xf32>
    %4 = vector.broadcast %3 : vector<32x1xf32> to vector<32x8xf32>
    %5 = arith.addf %2, %4 : vector<32x8xf32>
    %cst_5 = arith.constant 0.000000e+00 : f32
    %6 = vector.broadcast %cst_5 : f32 to vector<32x8xf32>
    %7 = arith.maximumf %5, %6 : vector<32x8xf32>
    %c0_6 = arith.constant 0 : index
    %c0_7 = arith.constant 0 : index
    %8 = vector.load %arg4[%c0_6, %c0_7] : memref<32x32xf32, #tpu.memory_space<vmem>>, vector<32x32xf32>
    %cst_8 = arith.constant dense<0.000000e+00> : vector<32x8xf32>
    %9 = tpu.matmul %8, %7, %cst_8 {dimension_numbers = #tpu.dot_dimension_numbers<[1], [0], [0], [1], [0, 0, 1, 1], [], []>} : vector<32x32xf32>, vector<32x8xf32>, vector<32x8xf32> -> vector<32x8xf32>
    %c0_9 = arith.constant 0 : index
    %c0_10 = arith.constant 0 : index
    %10 = vector.load %arg5[%c0_9, %c0_10] : memref<32x1xf32, #tpu.memory_space<vmem>>, vector<32x1xf32>
    %11 = vector.broadcast %10 : vector<32x1xf32> to vector<32x8xf32>
    %12 = arith.addf %9, %11 : vector<32x8xf32>
    %cst_11 = arith.constant 0.000000e+00 : f32
    %13 = vector.broadcast %cst_11 : f32 to vector<32x8xf32>
    %14 = arith.maximumf %12, %13 : vector<32x8xf32>
    %c0_12 = arith.constant 0 : index
    %c0_13 = arith.constant 0 : index
    %15 = vector.load %arg6[%c0_12, %c0_13] : memref<1x32xf32, #tpu.memory_space<vmem>>, vector<1x32xf32>
    %cst_14 = arith.constant dense<0.000000e+00> : vector<1x8xf32>
    %16 = tpu.matmul %15, %14, %cst_14 {dimension_numbers = #tpu.dot_dimension_numbers<[1], [0], [0], [1], [0, 0, 1, 1], [], []>} : vector<1x32xf32>, vector<32x8xf32>, vector<1x8xf32> -> vector<1x8xf32>
    %c0_15 = arith.constant 0 : index
    %c0_16 = arith.constant 0 : index
    %17 = vector.load %arg7[%c0_15, %c0_16] : memref<1x1xf32, #tpu.memory_space<vmem>>, vector<1x1xf32>
    %18 = vector.broadcast %17 : vector<1x1xf32> to vector<1x8xf32>
    %19 = arith.addf %16, %18 : vector<1x8xf32>
    %cst_17 = arith.constant 0.000000e+00 : f32
    %20 = vector.broadcast %cst_17 : f32 to vector<1x8xf32>
    %21 = arith.cmpf ogt, %19, %20 : vector<1x8xf32>
    %cst_18 = arith.constant 1.000000e+00 : f32
    %22 = vector.broadcast %cst_18 : f32 to vector<1x8xf32>
    %23 = arith.addf %19, %22 : vector<1x8xf32>
    %24 = math.exp %19 : vector<1x8xf32>
    %25 = arith.select %21, %23, %24 : vector<1x8xi1>, vector<1x8xf32>
    %c0_19 = arith.constant 0 : index
    %c0_20 = arith.constant 0 : index
    %26 = vector.load %arg8[%c0_19, %c0_20] : memref<1x8xf32, #tpu.memory_space<vmem>>, vector<1x8xf32>
    tpu.vector_store %arg8[%c0_19, %c0_20], %25 {strides = array<i32>} : memref<1x8xf32, #tpu.memory_space<vmem>>, vector<1x8xf32>,
    return
  }
  func.func @transform_0(%arg0: i32) -> (i32, i32) {
    %c0_i32 = arith.constant 0 : i32
    %c0_i32_0 = arith.constant 0 : i32
    return %c0_i32, %arg0 : i32, i32
  }
  func.func @transform_1(%arg0: i32) -> (i32, i32) {
    %c0_i32 = arith.constant 0 : i32
    %c0_i32_0 = arith.constant 0 : i32
    %c0_i32_1 = arith.constant 0 : i32
    return %c0_i32, %c0_i32_0 : i32, i32
  }
  func.func @transform_2(%arg0: i32) -> (i32, i32) {
    %c0_i32 = arith.constant 0 : i32
    %c0_i32_0 = arith.constant 0 : i32
    %c0_i32_1 = arith.constant 0 : i32
    return %c0_i32, %c0_i32_0 : i32, i32
  }
  func.func @transform_3(%arg0: i32) -> (i32, i32) {
    %c0_i32 = arith.constant 0 : i32
    %c0_i32_0 = arith.constant 0 : i32
    %c0_i32_1 = arith.constant 0 : i32
    return %c0_i32, %c0_i32_0 : i32, i32
  }
  func.func @transform_4(%arg0: i32) -> (i32, i32) {
    %c0_i32 = arith.constant 0 : i32
    %c0_i32_0 = arith.constant 0 : i32
    %c0_i32_1 = arith.constant 0 : i32
    return %c0_i32, %c0_i32_0 : i32, i32
  }
  func.func @transform_5(%arg0: i32) -> (i32, i32) {
    %c0_i32 = arith.constant 0 : i32
    %c0_i32_0 = arith.constant 0 : i32
    %c0_i32_1 = arith.constant 0 : i32
    return %c0_i32, %c0_i32_0 : i32, i32
  }
  func.func @transform_6(%arg0: i32) -> (i32, i32) {
    %c0_i32 = arith.constant 0 : i32
    %c0_i32_0 = arith.constant 0 : i32
    %c0_i32_1 = arith.constant 0 : i32
    return %c0_i32, %c0_i32_0 : i32, i32
  }
  func.func @transform_7(%arg0: i32) -> (i32, i32) {
    %c0_i32 = arith.constant 0 : i32
    %c0_i32_0 = arith.constant 0 : i32
    return %c0_i32, %arg0 : i32, i32
  }
}

</mosaic_0001>

<llo_original>
// kernel: tpu_custom_call.1
$region0: #{tpu_custom_call.1}
  #allocation0 [shape = 'u32[]', space=smem, size = 0x4, offset = 0x4, fixed_abs, tag = 'smem constant byte address 0x4 - core index']
  #allocation1 [shape = 'u32[144,128]{1,0:T(1,128)}', space=vmem, size = 0x12000, scoped, tag = 'internal scratch']
  #allocation2 [shape = 'f32[1,1]{1,0:T(1,128)S(1)}', space=vmem, size = 0x200, scoped, tag = 'scoped memory for tpu_custom_call.1']
  %s0 = inlined_call_operand.vmem [shape: f32[4,8], index: 0, kind: input, shape index: {}]
  %s1 = inlined_call_operand.vmem [shape: f32[32,4], index: 1, kind: input, shape index: {}]
  %s2 = inlined_call_operand.vmem [shape: f32[32,1], index: 2, kind: input, shape index: {}]
  %s3 = inlined_call_operand.vmem [shape: f32[32,32], index: 3, kind: input, shape index: {}]
  %s4 = inlined_call_operand.vmem [shape: f32[32,1], index: 4, kind: input, shape index: {}]
  %s5 = inlined_call_operand.vmem [shape: f32[1,32], index: 5, kind: input, shape index: {}]
  %s6 = inlined_call_operand.<no memory space> [shape: f32[1,1], index: 6, kind: input, shape index: {}]
  %s7 = inlined_call_operand.hbm [shape: f32[1,8], index: 7, kind: output, shape index: {}]
  %s8 = sld [smem:[#allocation0]]
  $region38: #{tpu_custom_call.1} parent=0
    _
  %s10 = ssub.s32 1, %s8
  %s11 = scalar_select 0, %s10, %s8
  %v12 = vstv %s6
  %13 = vst [vmem:[#allocation2] sm:$0x1] %v12
  $region1: #{tpu_custom_call.1} parent=0
    #allocation3 [shape = 'u8[512]{0}', space=vmem, size = 0x400, scoped, tag = 'output window, operand 0, single buffered']
    #allocation4 [shape = 's32[1]{0}', space=sflag, size = 0x4, scoped, tag = 'scoped memory for tpu_custom_call.1']
    %14 = vsyncpa [#allocation4], 0
    // Predicated region
    $region2: #{tpu_custom_call.1} parent=1 // pred_check
      _
    $region3: #{tpu_custom_call.1} parent=1 // pred_check_branch
      %16 = sbr.rel (0) target = $region5
    $region4: #{tpu_custom_call.1} parent=1 // pred_region
      _
    $region5: #{tpu_custom_call.1} parent=1 // pred_fallthru
      _
    // Predicated region
    $region6: #{tpu_custom_call.1} parent=1 // pred_check
      _
    $region7: #{tpu_custom_call.1} parent=1 // pred_check_branch
      %18 = sbr.rel (0) target = $region9
    $region8: #{tpu_custom_call.1} parent=1 // pred_region
      _
    $region9: #{tpu_custom_call.1} parent=1 // pred_fallthru
      _
    // Predicated region
    $region10: #{tpu_custom_call.1} parent=1 // pred_check
      _
    $region11: #{tpu_custom_call.1} parent=1 // pred_check_branch
      %20 = sbr.rel (0) target = $region13
    $region12: #{tpu_custom_call.1} parent=1 // pred_region
      _
    $region13: #{tpu_custom_call.1} parent=1 // pred_fallthru
      _
    // Predicated region
    $region14: #{tpu_custom_call.1} parent=1 // pred_check
      _
    $region15: #{tpu_custom_call.1} parent=1 // pred_check_branch
      %22 = sbr.rel (0) target = $region17
    $region16: #{tpu_custom_call.1} parent=1 // pred_region
      _
    $region17: #{tpu_custom_call.1} parent=1 // pred_fallthru
      _
    // Predicated region
    $region18: #{tpu_custom_call.1} parent=1 // pred_check
      _
    $region19: #{tpu_custom_call.1} parent=1 // pred_check_branch
      %24 = sbr.rel (0) target = $region21
    $region20: #{tpu_custom_call.1} parent=1 // pred_region
      _
    $region21: #{tpu_custom_call.1} parent=1 // pred_fallthru
      _
    // Predicated region
    $region22: #{tpu_custom_call.1} parent=1 // pred_check
      _
    $region23: #{tpu_custom_call.1} parent=1 // pred_check_branch
      %26 = sbr.rel (0) target = $region25
    $region24: #{tpu_custom_call.1} parent=1 // pred_region
      _
    $region25: #{tpu_custom_call.1} parent=1 // pred_fallthru
      _
    // Predicated region
    $region26: #{tpu_custom_call.1} parent=1 // pred_check
      _
    $region27: #{tpu_custom_call.1} parent=1 // pred_check_branch
      %28 = sbr.rel (0) target = $region29
    $region28: #{tpu_custom_call.1} parent=1 // pred_region
      _
    $region29: #{tpu_custom_call.1} parent=1 // pred_fallthru
      _
    %v29 = vld [vmem:[%s1] sm:$0xff]
    %v30 = vld [vmem:[%s1 + $0x8] sm:$0xff]
    %v31 = vld [vmem:[%s1 + $0x10] sm:$0xff]
    %v32 = vld [vmem:[%s1 + $0x18] sm:$0xff]
    %v33 = vld [vmem:[%s0] sm:$0xf]
    %v34 = vld [vmem:[%s2] sm:$0xff]
    %v35 = vld [vmem:[%s2 + $0x8] sm:$0xff]
    %v36 = vld [vmem:[%s2 + $0x10] sm:$0xff]
    %v37 = vld [vmem:[%s2 + $0x18] sm:$0xff]
    %39 = vset.pattern.permute.xlu0 0
    %40 = vperm.xlu0 %39, %v34
    %v41 = vpop.permute.xlu0 %40
    %44 = vset.pattern.permute.xlu0 0
    %45 = vperm.xlu0 %44, %v35
    %v46 = vpop.permute.xlu0 %45
    %49 = vset.pattern.permute.xlu0 0
    %50 = vperm.xlu0 %49, %v36
    %v51 = vpop.permute.xlu0 %50
    %54 = vset.pattern.permute.xlu0 0
    %55 = vperm.xlu0 %54, %v37
    %v56 = vpop.permute.xlu0 %55
    %vm58 = vcmask 31744
    %v60 = vsel %vm58, %v29, 0
    %v63 = vsel %vm58, %v30, 0
    %v66 = vsel %vm58, %v31, 0
    %v69 = vsel %vm58, %v32, 0
    %vm71 = vcmask 1043456
    %v73 = vsel %vm71, %v33, 0
    %75 = vmatprep.subr.mxu0 0.0
    %76 = vmatpush1.msra.mxu0 0.0
    %77 = vmatprep.subr.mxu0 0.0
    %78 = vmatpush1.msra.mxu0 0.0
    %79 = vmatprep.subr.mxu0 0.0
    %80 = vmatpush1.msra.mxu0 0.0
    %81 = vmatprep.subr.mxu0 0.0
    %82 = vmatpush1.msra.mxu0 0.0
    %83 = vmatprep.subr.mxu0 0.0
    %84 = vmatpush1.msra.mxu0 0.0
    %85 = vmatprep.subr.mxu0 0.0
    %86 = vmatpush1.msra.mxu0 0.0
    %87 = vmatprep.subr.mxu0 0.0
    %88 = vmatpush1.msra.mxu0 0.0
    %89 = vmatprep.subr.mxu0 0.0
    %90 = vmatpush1.msra.mxu0 0.0
    %91 = vmatprep.subr.mxu0 0.0
    %92 = vmatpush1.msra.mxu0 0.0
    %93 = vmatprep.subr.mxu0 0.0
    %94 = vmatpush1.msra.mxu0 0.0
    %95 = vmatprep.subr.mxu0 0.0
    %96 = vmatpush1.msra.mxu0 0.0
    %97 = vmatprep.subr.mxu0 0.0
    %98 = vmatpush1.msra.mxu0 0.0
    %99 = vmatprep.subr.mxu0 0.0
    %100 = vmatpush1.msra.mxu0 0.0
    %101 = vmatprep.subr.mxu0 0.0
    %102 = vmatpush1.msra.mxu0 0.0
    %103 = vmatprep.subr.mxu0 0.0
    %104 = vmatpush1.msra.mxu0 0.0
    %105 = vmatprep.subr.mxu0 0.0
    %106 = vmatpush1.msra.mxu0 %v73
    %107 = vmatprep.subr.mxu0 0.0
    %108 = vmatpush2.msra.mxu0 0.0
    %109 = vmatprep.subr.mxu0 0.0
    %110 = vmatpush2.msra.mxu0 0.0
    %111 = vmatprep.subr.mxu0 0.0
    %112 = vmatpush2.msra.mxu0 0.0
    %113 = vmatprep.subr.mxu0 0.0
    %114 = vmatpush2.msra.mxu0 0.0
    %115 = vmatprep.subr.mxu0 0.0
    %116 = vmatpush2.msra.mxu0 0.0
    %117 = vmatprep.subr.mxu0 0.0
    %118 = vmatpush2.msra.mxu0 0.0
    %119 = vmatprep.subr.mxu0 0.0
    %120 = vmatpush2.msra.mxu0 0.0
    %121 = vmatprep.subr.mxu0 0.0
    %122 = vmatpush2.msra.mxu0 0.0
    %123 = vmatprep.subr.mxu0 0.0
    %124 = vmatpush2.msra.mxu0 0.0
    %125 = vmatprep.subr.mxu0 0.0
    %126 = vmatpush2.msra.mxu0 0.0
    %127 = vmatprep.subr.mxu0 0.0
    %128 = vmatpush2.msra.mxu0 0.0
    %129 = vmatprep.subr.mxu0 0.0
    %130 = vmatpush2.msra.mxu0 0.0
    %131 = vmatprep.subr.mxu0 0.0
    %132 = vmatpush2.msra.mxu0 0.0
    %133 = vmatprep.subr.mxu0 0.0
    %134 = vmatpush2.msra.mxu0 0.0
    %135 = vmatprep.subr.mxu0 0.0
    %136 = vmatpush2.msra.mxu0 0.0
    %137 = vmatprep.subr.mxu0 0.0
    %138 = vmatpush2.msra.mxu0 0.0
    %139 = vmatprep.mubr.f32.mxu0 0.0
    %140 = vmatmul.mubr.f32.gmra.mxu0 %v60
    %v141 = vpop.f32.mrf.mxu0
    %v142 = vadd.f32 %v41, %v141
    %v143 = vpop.f32.mrf.mxu0
    %144 = vmatprep.mubr.f32.mxu0 0.0
    %145 = vmatmul.mubr.f32.gmra.mxu0 %v63
    %v146 = vpop.f32.mrf.mxu0
    %v147 = vadd.f32 %v46, %v146
    %v148 = vpop.f32.mrf.mxu0
    %149 = vmatprep.mubr.f32.mxu0 0.0
    %150 = vmatmul.mubr.f32.gmra.mxu0 %v66
    %v151 = vpop.f32.mrf.mxu0
    %v152 = vadd.f32 %v51, %v151
    %v153 = vpop.f32.mrf.mxu0
    %154 = vmatprep.mubr.f32.mxu0 0.0
    %155 = vmatmul.mubr.f32.gmra.mxu0 %v69
    %v156 = vpop.f32.mrf.mxu0
    %v157 = vadd.f32 %v56, %v156
    %v158 = vpop.f32.mrf.mxu0
    %159 = vdwg.mxu0
    %v160 = vmax.f32 %v142, 0.0
    %v161 = vmax.f32 %v147, 0.0
    %v162 = vmax.f32 %v152, 0.0
    %v163 = vmax.f32 %v157, 0.0
    %v164 = vld [vmem:[%s3] sm:$0xff]
    %v165 = vld [vmem:[%s3 + $0x8] sm:$0xff]
    %v166 = vld [vmem:[%s3 + $0x10] sm:$0xff]
    %v167 = vld [vmem:[%s3 + $0x18] sm:$0xff]
    %v168 = vld [vmem:[%s4] sm:$0xff]
    %v169 = vld [vmem:[%s4 + $0x8] sm:$0xff]
    %v170 = vld [vmem:[%s4 + $0x10] sm:$0xff]
    %v171 = vld [vmem:[%s4 + $0x18] sm:$0xff]
    %173 = vset.pattern.permute.xlu0 0
    %174 = vperm.xlu0 %173, %v168
    %v175 = vpop.permute.xlu0 %174
    %178 = vset.pattern.permute.xlu0 0
    %179 = vperm.xlu0 %178, %v169
    %v180 = vpop.permute.xlu0 %179
    %183 = vset.pattern.permute.xlu0 0
    %184 = vperm.xlu0 %183, %v170
    %v185 = vpop.permute.xlu0 %184
    %188 = vset.pattern.permute.xlu0 0
    %189 = vperm.xlu0 %188, %v171
    %v190 = vpop.permute.xlu0 %189
    %vm192 = vcmask 261120
    %v194 = vsel %vm192, %v164, 0
    %v197 = vsel %vm192, %v165, 0
    %v200 = vsel %vm192, %v166, 0
    %v203 = vsel %vm192, %v167, 0
    %205 = vmatprep.subr.mxu0 0.0
    %206 = vmatpush1.msra.mxu0 0.0
    %207 = vmatprep.subr.mxu0 0.0
    %208 = vmatpush1.msra.mxu0 0.0
    %209 = vmatprep.subr.mxu0 0.0
    %210 = vmatpush1.msra.mxu0 0.0
    %211 = vmatprep.subr.mxu0 0.0
    %212 = vmatpush1.msra.mxu0 0.0
    %213 = vmatprep.subr.mxu0 0.0
    %214 = vmatpush1.msra.mxu0 0.0
    %215 = vmatprep.subr.mxu0 0.0
    %216 = vmatpush1.msra.mxu0 0.0
    %217 = vmatprep.subr.mxu0 0.0
    %218 = vmatpush1.msra.mxu0 0.0
    %219 = vmatprep.subr.mxu0 0.0
    %220 = vmatpush1.msra.mxu0 0.0
    %221 = vmatprep.subr.mxu0 0.0
    %222 = vmatpush1.msra.mxu0 0.0
    %223 = vmatprep.subr.mxu0 0.0
    %224 = vmatpush1.msra.mxu0 0.0
    %225 = vmatprep.subr.mxu0 0.0
    %226 = vmatpush1.msra.mxu0 0.0
    %227 = vmatprep.subr.mxu0 0.0
    %228 = vmatpush1.msra.mxu0 0.0
    %229 = vmatprep.subr.mxu0 0.0
    %230 = vmatpush1.msra.mxu0 %v163
    %231 = vmatprep.subr.mxu0 0.0
    %232 = vmatpush1.msra.mxu0 %v162
    %233 = vmatprep.subr.mxu0 0.0
    %234 = vmatpush1.msra.mxu0 %v161
    %235 = vmatprep.subr.mxu0 0.0
    %236 = vmatpush1.msra.mxu0 %v160
    %237 = vmatprep.subr.mxu0 0.0
    %238 = vmatpush2.msra.mxu0 0.0
    %239 = vmatprep.subr.mxu0 0.0
    %240 = vmatpush2.msra.mxu0 0.0
    %241 = vmatprep.subr.mxu0 0.0
    %242 = vmatpush2.msra.mxu0 0.0
    %243 = vmatprep.subr.mxu0 0.0
    %244 = vmatpush2.msra.mxu0 0.0
    %245 = vmatprep.subr.mxu0 0.0
    %246 = vmatpush2.msra.mxu0 0.0
    %247 = vmatprep.subr.mxu0 0.0
    %248 = vmatpush2.msra.mxu0 0.0
    %249 = vmatprep.subr.mxu0 0.0
    %250 = vmatpush2.msra.mxu0 0.0
    %251 = vmatprep.subr.mxu0 0.0
    %252 = vmatpush2.msra.mxu0 0.0
    %253 = vmatprep.subr.mxu0 0.0
    %254 = vmatpush2.msra.mxu0 0.0
    %255 = vmatprep.subr.mxu0 0.0
    %256 = vmatpush2.msra.mxu0 0.0
    %257 = vmatprep.subr.mxu0 0.0
    %258 = vmatpush2.msra.mxu0 0.0
    %259 = vmatprep.subr.mxu0 0.0
    %260 = vmatpush2.msra.mxu0 0.0
    %261 = vmatprep.subr.mxu0 0.0
    %262 = vmatpush2.msra.mxu0 0.0
    %263 = vmatprep.subr.mxu0 0.0
    %264 = vmatpush2.msra.mxu0 0.0
    %265 = vmatprep.subr.mxu0 0.0
    %266 = vmatpush2.msra.mxu0 0.0
    %267 = vmatprep.subr.mxu0 0.0
    %268 = vmatpush2.msra.mxu0 0.0
    %269 = vmatprep.mubr.f32.mxu0 0.0
    %270 = vmatmul.mubr.f32.gmra.mxu0 %v194
    %v271 = vpop.f32.mrf.mxu0
    %v272 = vadd.f32 %v175, %v271
    %v273 = vpop.f32.mrf.mxu0
    %274 = vmatprep.mubr.f32.mxu0 0.0
    %275 = vmatmul.mubr.f32.gmra.mxu0 %v197
    %v276 = vpop.f32.mrf.mxu0
    %v277 = vadd.f32 %v180, %v276
    %v278 = vpop.f32.mrf.mxu0
    %279 = vmatprep.mubr.f32.mxu0 0.0
    %280 = vmatmul.mubr.f32.gmra.mxu0 %v200
    %v281 = vpop.f32.mrf.mxu0
    %v282 = vadd.f32 %v185, %v281
    %v283 = vpop.f32.mrf.mxu0
    %284 = vmatprep.mubr.f32.mxu0 0.0
    %285 = vmatmul.mubr.f32.gmra.mxu0 %v203
    %v286 = vpop.f32.mrf.mxu0
    %v287 = vadd.f32 %v190, %v286
    %v288 = vpop.f32.mrf.mxu0
    %289 = vdwg.mxu0
    %v290 = vmax.f32 %v272, 0.0
    %v291 = vmax.f32 %v277, 0.0
    %v292 = vmax.f32 %v282, 0.0
    %v293 = vmax.f32 %v287, 0.0
    %v294 = vld [vmem:[%s5] sm:$0x1]
    %v295 = vld [vmem:[#allocation2] sm:$0x1]
    %297 = vset.pattern.permute.xlu0 0
    %298 = vperm.xlu0 %297, %v295
    %v299 = vpop.permute.xlu0 %298
    %v301 = vlaneseq
    %v302 = vshrl.u32 %v301, 7
    %v303 = vsub.s32 0, %v302
    %v304 = vrot.slane %v299, %v303
    %v306 = vsel %vm192, %v294, 0
    %308 = vmatprep.subr.mxu0 0.0
    %309 = vmatpush1.msra.mxu0 0.0
    %310 = vmatprep.subr.mxu0 0.0
    %311 = vmatpush1.msra.mxu0 0.0
    %312 = vmatprep.subr.mxu0 0.0
    %313 = vmatpush1.msra.mxu0 0.0
    %314 = vmatprep.subr.mxu0 0.0
    %315 = vmatpush1.msra.mxu0 0.0
    %316 = vmatprep.subr.mxu0 0.0
    %317 = vmatpush1.msra.mxu0 0.0
    %318 = vmatprep.subr.mxu0 0.0
    %319 = vmatpush1.msra.mxu0 0.0
    %320 = vmatprep.subr.mxu0 0.0
    %321 = vmatpush1.msra.mxu0 0.0
    %322 = vmatprep.subr.mxu0 0.0
    %323 = vmatpush1.msra.mxu0 0.0
    %324 = vmatprep.subr.mxu0 0.0
    %325 = vmatpush1.msra.mxu0 0.0
    %326 = vmatprep.subr.mxu0 0.0
    %327 = vmatpush1.msra.mxu0 0.0
    %328 = vmatprep.subr.mxu0 0.0
    %329 = vmatpush1.msra.mxu0 0.0
    %330 = vmatprep.subr.mxu0 0.0
    %331 = vmatpush1.msra.mxu0 0.0
    %332 = vmatprep.subr.mxu0 0.0
    %333 = vmatpush1.msra.mxu0 %v293
    %334 = vmatprep.subr.mxu0 0.0
    %335 = vmatpush1.msra.mxu0 %v292
    %336 = vmatprep.subr.mxu0 0.0
    %337 = vmatpush1.msra.mxu0 %v291
    %338 = vmatprep.subr.mxu0 0.0
    %339 = vmatpush1.msra.mxu0 %v290
    %340 = vmatprep.subr.mxu0 0.0
    %341 = vmatpush2.msra.mxu0 0.0
    %342 = vmatprep.subr.mxu0 0.0
    %343 = vmatpush2.msra.mxu0 0.0
    %344 = vmatprep.subr.mxu0 0.0
    %345 = vmatpush2.msra.mxu0 0.0
    %346 = vmatprep.subr.mxu0 0.0
    %347 = vmatpush2.msra.mxu0 0.0
    %348 = vmatprep.subr.mxu0 0.0
    %349 = vmatpush2.msra.mxu0 0.0
    %350 = vmatprep.subr.mxu0 0.0
    %351 = vmatpush2.msra.mxu0 0.0
    %352 = vmatprep.subr.mxu0 0.0
    %353 = vmatpush2.msra.mxu0 0.0
    %354 = vmatprep.subr.mxu0 0.0
    %355 = vmatpush2.msra.mxu0 0.0
    %356 = vmatprep.subr.mxu0 0.0
    %357 = vmatpush2.msra.mxu0 0.0
    %358 = vmatprep.subr.mxu0 0.0
    %359 = vmatpush2.msra.mxu0 0.0
    %360 = vmatprep.subr.mxu0 0.0
    %361 = vmatpush2.msra.mxu0 0.0
    %362 = vmatprep.subr.mxu0 0.0
    %363 = vmatpush2.msra.mxu0 0.0
    %364 = vmatprep.subr.mxu0 0.0
    %365 = vmatpush2.msra.mxu0 0.0
    %366 = vmatprep.subr.mxu0 0.0
    %367 = vmatpush2.msra.mxu0 0.0
    %368 = vmatprep.subr.mxu0 0.0
    %369 = vmatpush2.msra.mxu0 0.0
    %370 = vmatprep.subr.mxu0 0.0
    %371 = vmatpush2.msra.mxu0 0.0
    %372 = vmatprep.mubr.f32.mxu0 0.0
    %373 = vmatmul.mubr.f32.gmra.mxu0 %v306
    %v374 = vpop.f32.mrf.mxu0
    %v375 = vadd.f32 %v304, %v374
    %v376 = vpop.f32.mrf.mxu0
    %377 = vdwg.mxu0
    %vm378 = vcmp.gt.f32.partialorder %v375, 0.0
    %v379 = vadd.f32 %v375, 1.0
    %v380 = vmul.f32 %v375, 1.442695
    %v381 = vpow.pop %v380
    %v382 = vsel %vm378, %v379, %v381
    %vm383 = vcmask 57344
    %384 = vst.msk [vmem:[#allocation3] sm:$0x1] %vm383, %v382
    // Predicated region
    $region30: #{tpu_custom_call.1} parent=1 // pred_check
      _
    $region31: #{tpu_custom_call.1} parent=1 // pred_check_branch
      %386 = sbr.rel (0) target = $region33
    $region32: #{tpu_custom_call.1} parent=1 // pred_region
      %s388 = ssub.s32 16, 16
      %389 = vsyncadd [#allocation4], %s388
      %s391 = sshll.u32 [#allocation3], 4
      %s392 = int_to_ptr.vmem [resolvable:$true] %s391
      %394 = dma.vmem_to_hbm [thread:$0]  %s392, 16, %s7, [#allocation4]
    $region33: #{tpu_custom_call.1} parent=1 // pred_fallthru
      _
    // Predicated region
    $region34: #{tpu_custom_call.1} parent=1 // pred_check
      _
    $region35: #{tpu_custom_call.1} parent=1 // pred_check_branch
      %396 = sbr.rel (0) target = $region37
    $region36: #{tpu_custom_call.1} parent=1 // pred_region
      %397 = dma.done [#allocation4], 16
    $region37: #{tpu_custom_call.1} parent=1 // pred_fallthru
      _
    %398 = vsyncpa [#allocation4], 1

</llo_original>
